<compile_context>
chip_gen: v7x
topology: tpu7x:2x2x1
jax: 0.10.0
libtpu: 0.0.40
codegen_flags: <defaults>
</compile_context>

<pallas_src>
import functools

import jax
import jax.numpy as jnp
from jax.experimental import pallas as pl
from jax.experimental.pallas import tpu as pltpu


def _block_kernel(p1_ref, w1_ref, w2_ref, sc_ref, coef_ref, batt_ref,
                  o_ref, pad_ref, *, H, W, Cin, Cout, identity):
    Wp = W + 2
    L = H * Wp                                   # extended spatial length
    offs = [dy * Wp + dx for dy in range(3) for dx in range(3)]
    base = 2 * Wp + 2                            # >= max(offs); staging origin
    Fs = pad_ref.shape[1]                        # base + L
    bf16 = jnp.bfloat16

    # ---- conv1: one fused im2col matmul (bf16 in, f32 accumulate) ----------
    p1 = p1_ref[0]                               # (9*Cin, L) bf16
    h1 = jnp.dot(w1_ref[...], p1, preferred_element_type=jnp.float32)  # (Cout, L)

    # ---- bn1 (folded scale/bias) + relu ------------------------------------
    h1 = jnp.maximum(h1 * coef_ref[:, 0:1] + coef_ref[:, 1:2], 0.0)

    # ---- zero junk columns (doubles as conv2's horizontal zero padding) ----
    col = jax.lax.broadcasted_iota(jnp.int32, (1, L), 1)
    h1 = jnp.where(col % Wp < W, h1, 0.0).astype(bf16)   # single f32->bf16 cast

    # ---- stage conv2's im2col directly in the bf16 scratch ------------------
    # Row block k of the scratch holds h1 shifted by offs[k]; only the thin
    # vertical-padding borders of the read window need explicit zeroing (the
    # interior is fully overwritten each step, so "parallel" batch is safe).
    zero_cols = jnp.zeros((9 * Cout, base), bf16)
    pad_ref[pl.ds(0, 9 * Cout), pl.ds(0, base)] = zero_cols
    pad_ref[pl.ds(0, 9 * Cout), pl.ds(L, Fs - L)] = zero_cols[:, :Fs - L]
    for k, off in enumerate(offs):
        pad_ref[pl.ds(k * Cout, Cout), pl.ds(base - off, L)] = h1

    # ---- conv2: one fused im2col matmul over the staged slab ---------------
    p2 = pad_ref[pl.ds(0, 9 * Cout), pl.ds(Wp + 1, L)]   # (9*Cout, L) bf16
    out = jnp.dot(w2_ref[...], p2, preferred_element_type=jnp.float32)
    out = out * coef_ref[:, 2:3] + coef_ref[:, 3:4]      # bn2 (folded)

    # ---- shortcut ------------------------------------------------------------
    if identity:
        out = out + sc_ref[0]                    # f32 residual, no rounding
    else:
        xc = p1[4 * Cin:5 * Cin, :]              # center tap = interior x (bf16)
        sc = jnp.dot(sc_ref[...], xc, preferred_element_type=jnp.float32)
        out = out + sc * coef_ref[:, 4:5] + coef_ref[:, 5:6]
    out = jnp.maximum(out, 0.0)

    # ---- sigmoid self-attention: VPU mul + sublane reduce + EUP sigmoid -----
    logits = jnp.sum(out * coef_ref[:, 6:7], axis=0, keepdims=True) + batt_ref[0]
    out = out * jax.nn.sigmoid(logits)

    # ---- lane-dense channel-major store (already the output layout) ---------
    o_ref[0] = out.astype(o_ref.dtype)           # (Cout, L)


def _fold_bn(gamma, beta, mean, var, eps=1e-5):
    scale = gamma / jnp.sqrt(var + eps)
    bias = beta - mean * scale
    return scale, bias


@jax.jit
def basic_block_with_attention(x_nchw, params):
    """Forward pass of BasicBlockWithAttention (stride=1, eval-mode BN)."""
    # TODO(synk): stride>1 (downsampling) path not implemented.
    N, Cin, H, W = x_nchw.shape
    Cout = params["w1"].shape[-1]
    Wp = W + 2
    L = H * Wp                                   # 2 junk columns per row
    F = (H + 3) * Wp                             # 1 top + 2 bottom pad rows
    offs = [dy * Wp + dx for dy in range(3) for dx in range(3)]
    base = 2 * Wp + 2
    Fs = base + L
    identity = params["wsc"] is None

    # Channel-major padded flat input (N, Cin, F).
    xp = jnp.pad(x_nchw, ((0, 0), (0, 0), (1, 2), (1, 1))).reshape(N, Cin, F)

    # conv1 im2col built in the wrapper (tiny Cin); cast to bf16 ONCE here.
    # TODO(synk): for real ResNet Cin>=64 build the conv1 im2col in VMEM instead
    # (wrapper im2col multiplies HBM input traffic by up to 9x).
    p1 = jnp.stack([xp[:, :, off:off + L] for off in offs], axis=1)  # (N,9,Cin,L)
    p1 = p1.reshape(N, 9 * Cin, L).astype(jnp.bfloat16)

    def cm(w_hwio):  # HWIO (3,3,I,O) -> channel-major im2col weight (O, 9*I)
        i, o = w_hwio.shape[2], w_hwio.shape[3]
        return jnp.transpose(w_hwio.reshape(9, i, o), (2, 0, 1)).reshape(o, 9 * i)

    w1cm = cm(params["w1"]).astype(jnp.bfloat16)
    w2cm = cm(params["w2"]).astype(jnp.bfloat16)

    bn1s, bn1b = _fold_bn(*params["bn1"])
    bn2s, bn2b = _fold_bn(*params["bn2"])
    if identity:
        bnscs = jnp.zeros((Cout,), jnp.float32)
        bnscb = jnp.zeros((Cout,), jnp.float32)
        sc_arg = xp[:, :, Wp + 1:Wp + 1 + L]     # f32 residual (N, Cout, L)
        sc_spec = pl.BlockSpec((1, Cout, L), lambda n: (n, 0, 0))
    else:
        bnscs, bnscb = _fold_bn(*params["bnsc"])
        sc_arg = jnp.transpose(params["wsc"]).astype(jnp.bfloat16)   # (Cout, Cin)
        sc_spec = pl.BlockSpec((Cout, Cin), lambda n: (0, 0))

    # Pack the 7 per-channel vectors into one (Cout, 8) input (row 7 unused).
    coef = jnp.stack([bn1s, bn1b, bn2s, bn2b, bnscs, bnscb,
                      params["watt"].reshape(Cout),
                      jnp.zeros((Cout,), jnp.float32)], axis=1)
    batt = params["batt"].reshape(1)

    full = lambda shape: pl.BlockSpec(shape, lambda n: (0,) * len(shape))

    # TODO(synk): for real ResNet shapes add a row-band spatial grid axis
    # (1-row halo), block several images per step when per-image work is small
    # (v6e overhead), and set vmem_limit_bytes explicitly for v7x's 64 MiB VMEM.
    out_ext = pl.pallas_call(
        functools.partial(_block_kernel, H=H, W=W, Cin=Cin, Cout=Cout,
                          identity=identity),
        out_shape=jax.ShapeDtypeStruct((N, Cout, L), x_nchw.dtype),
        grid_spec=pltpu.PrefetchScalarGridSpec(
            num_scalar_prefetch=0,
            grid=(N,),
            in_specs=[
                pl.BlockSpec((1, 9 * Cin, L), lambda n: (n, 0, 0)),  # conv1 im2col
                full((Cout, 9 * Cin)),                               # w1 (bf16)
                full((Cout, 9 * Cout)),                              # w2 (bf16)
                sc_spec,                                             # wsc or residual
                full((Cout, 8)),                                     # packed bn/watt
                pl.BlockSpec(memory_space=pltpu.MemorySpace.SMEM),   # batt scalar
            ],
            out_specs=pl.BlockSpec((1, Cout, L), lambda n: (n, 0, 0)),
            scratch_shapes=[pltpu.VMEM((9 * Cout, Fs), jnp.bfloat16)],
        ),
        compiler_params=pltpu.CompilerParams(
            dimension_semantics=("parallel",)),      # shard batch on v7x 2 TCs
    )(p1, w1cm, w2cm, sc_arg, coef, batt)

    # (N, Cout, H*Wp) -> drop the 2 junk columns per row -> NCHW.  No transpose.
    return out_ext.reshape(N, Cout, H, Wp)[:, :, :, :W]


def _ref_forward(x_nchw, params):
    """Pure-JAX f32 reference (lax.conv) of the same forward pass."""
    def conv(x, w_hwio, pad):
        w_oihw = jnp.transpose(w_hwio, (3, 2, 0, 1))
        return jax.lax.conv_general_dilated(
            x, w_oihw, (1, 1), ((pad, pad), (pad, pad)),
            dimension_numbers=("NCHW", "OIHW", "NCHW"))

    def bn(x, p):
        s, b = _fold_bn(*p)
        return x * s[None, :, None, None] + b[None, :, None, None]

    w1 = params["w1"]
    Cin, Cout = w1.shape[2], w1.shape[3]
    h1 = jax.nn.relu(bn(conv(x_nchw, w1, 1), params["bn1"]))
    out = bn(conv(h1, params["w2"], 1), params["bn2"])
    if params["wsc"] is None:
        sc = x_nchw                                         # identity shortcut
    else:
        sc = bn(conv(x_nchw, params["wsc"].reshape(1, 1, Cin, Cout), 0),
                params["bnsc"])
    out = jax.nn.relu(out + sc)
    watt = params["watt"].reshape(1, 1, Cout, 1)
    att = jax.nn.sigmoid(conv(out, watt, 0) + params["batt"][0])
    return out * att


def make_params(key, in_channels, out_channels):
    ks = jax.random.split(key, 12)
    f32 = jnp.float32
    w1 = 0.1 * jax.random.normal(ks[0], (3, 3, in_channels, out_channels), f32)
    w2 = 0.1 * jax.random.normal(ks[1], (3, 3, out_channels, out_channels), f32)
    if in_channels != out_channels:
        wsc = 0.1 * jax.random.normal(ks[2], (in_channels, out_channels), f32)
        bnsc = (1.0 + 0.1 * jax.random.normal(ks[3], (out_channels,), f32),
                0.1 * jax.random.normal(ks[4], (out_channels,), f32),
                0.1 * jax.random.normal(ks[5], (out_channels,), f32),
                1.0 + jax.nn.softplus(jax.random.normal(ks[6], (out_channels,), f32)))
    else:
        wsc = None          # identity shortcut (nn.Sequential())
        bnsc = None
    bn1 = (1.0 + 0.1 * jax.random.normal(ks[7], (out_channels,), f32),
           0.1 * jax.random.normal(ks[8], (out_channels,), f32),
           0.1 * jax.random.normal(ks[9], (out_channels,), f32),
           1.0 + jax.nn.softplus(jax.random.normal(ks[10], (out_channels,), f32)))
    bn2 = (1.0 + 0.05 * jnp.arange(out_channels, dtype=f32),
           0.02 * jnp.arange(out_channels, dtype=f32),
           0.01 * jnp.arange(out_channels, dtype=f32),
           1.0 + 0.03 * jnp.arange(out_channels, dtype=f32))
    watt = 0.1 * jax.random.normal(ks[11], (out_channels, 1), f32)
    batt = jnp.array([0.05], f32)
    return dict(w1=w1, w2=w2, wsc=wsc, watt=watt, batt=batt,
                bn1=bn1, bn2=bn2, bnsc=bnsc)


if __name__ == "__main__":
    key = jax.random.PRNGKey(0)
    kx1, kp1, kx2, kp2 = jax.random.split(key, 4)

    # Case 1: projection shortcut (Cin != Cout), the usual downsample-free block.
    N, Cin, Cout, H, W = 2, 4, 8, 16, 16
    x1 = jax.random.normal(kx1, (N, Cin, H, W), jnp.float32)   # PyTorch NCHW
    params1 = make_params(kp1, Cin, Cout)
    out1 = jax.block_until_ready(basic_block_with_attention(x1, params1))
    assert out1.shape == (N, Cout, H, W)
    ref1 = jax.block_until_ready(_ref_forward(x1, params1))
    # Tolerance covers bf16 MXU operands vs. the pure-f32 reference.
    assert jnp.allclose(out1, ref1, atol=4e-2, rtol=4e-2), (
        float(jnp.max(jnp.abs(out1 - ref1))))

    # Case 2: identity shortcut (Cin == Cout), f32 residual path in the kernel.
    x2 = jax.random.normal(kx2, (N, Cout, H, W), jnp.float32)
    params2 = make_params(kp2, Cout, Cout)
    out2 = jax.block_until_ready(basic_block_with_attention(x2, params2))
    assert out2.shape == (N, Cout, H, W)
    ref2 = jax.block_until_ready(_ref_forward(x2, params2))
    assert jnp.allclose(out2, ref2, atol=4e-2, rtol=4e-2), (
        float(jnp.max(jnp.abs(out2 - ref2))))

    print("KERNEL_OK")
</pallas_src>

<mosaic_0001>
module attributes {stable_mosaic.version = 11 : i64} {
  func.func @_block_kernel(%arg0: i32, %arg1: memref<1x36x288xbf16, #tpu.memory_space<vmem>>, %arg2: memref<8x36xbf16, #tpu.memory_space<vmem>>, %arg3: memref<8x72xbf16, #tpu.memory_space<vmem>>, %arg4: memref<8x4xbf16, #tpu.memory_space<vmem>>, %arg5: memref<8x8xf32, #tpu.memory_space<vmem>>, %arg6: memref<1xf32, #tpu.memory_space<smem>>, %arg7: memref<1x8x288xf32, #tpu.memory_space<vmem>>, %arg8: memref<72x326xbf16, #tpu.memory_space<vmem>>) attributes {dimension_semantics = [#tpu.dimension_semantics<parallel>], iteration_bounds = array<i64: 2>, scalar_prefetch = 0 : i64, scratch_operands = 1 : i64, tpu.core_type = #tpu.core_type<tc>, window_params = [{transform_indices = @transform_0, window_bounds = array<i64: 1, 36, 288>}, {pipeline_mode = #tpu.pipeline_mode<synchronous>, transform_indices = @transform_1, window_bounds = array<i64: 8, 36>}, {pipeline_mode = #tpu.pipeline_mode<synchronous>, transform_indices = @transform_2, window_bounds = array<i64: 8, 72>}, {pipeline_mode = #tpu.pipeline_mode<synchronous>, transform_indices = @transform_3, window_bounds = array<i64: 8, 4>}, {pipeline_mode = #tpu.pipeline_mode<synchronous>, transform_indices = @transform_4, window_bounds = array<i64: 8, 8>}, {transform_indices = @transform_5, window_bounds = array<i64: 1>}, {transform_indices = @transform_6, window_bounds = array<i64: 1, 8, 288>}]} {
    %c0 = arith.constant 0 : index
    %c0_0 = arith.constant 0 : index
    %c0_1 = arith.constant 0 : index
    %0 = vector.load %arg1[%c0, %c0_0, %c0_1] : memref<1x36x288xbf16, #tpu.memory_space<vmem>>, vector<1x36x288xbf16>
    %1 = vector.shape_cast %0 : vector<1x36x288xbf16> to vector<36x288xbf16>
    %c0_2 = arith.constant 0 : index
    %c0_3 = arith.constant 0 : index
    %2 = vector.load %arg2[%c0_2, %c0_3] : memref<8x36xbf16, #tpu.memory_space<vmem>>, vector<8x36xbf16>
    %cst = arith.constant dense<0.000000e+00> : vector<8x288xf32>
    %3 = tpu.matmul %2, %1, %cst {dimension_numbers = #tpu.dot_dimension_numbers<[1], [0], [0], [1], [0, 0, 1, 1], [], []>} : vector<8x36xbf16>, vector<36x288xbf16>, vector<8x288xf32> -> vector<8x288xf32>
    %c0_4 = arith.constant 0 : index
    %c0_5 = arith.constant 0 : index
    %4 = vector.load %arg5[%c0_4, %c0_5] : memref<8x8xf32, #tpu.memory_space<vmem>>, vector<8x1xf32>
    %5 = vector.broadcast %4 : vector<8x1xf32> to vector<8x288xf32>
    %6 = arith.mulf %3, %5 : vector<8x288xf32>
    %c0_6 = arith.constant 0 : index
    %c1 = arith.constant 1 : index
    %7 = vector.load %arg5[%c0_6, %c1] : memref<8x8xf32, #tpu.memory_space<vmem>>, vector<8x1xf32>
    %8 = vector.broadcast %7 : vector<8x1xf32> to vector<8x288xf32>
    %9 = arith.addf %6, %8 : vector<8x288xf32>
    %cst_7 = arith.constant 0.000000e+00 : f32
    %10 = vector.broadcast %cst_7 : f32 to vector<8x288xf32>
    %11 = arith.maximumf %9, %10 : vector<8x288xf32>
    %12 = tpu.iota {dimensions = array<i32: 1>} : vector<1x288xi32>
    %c18_i32 = arith.constant 18 : i32
    %c0_i32 = arith.constant 0 : i32
    %13 = arith.cmpi eq, %c18_i32, %c0_i32 : i32
    %c1_i32 = arith.constant 1 : i32
    %14 = arith.select %13, %c1_i32, %c18_i32 : i32
    %15 = vector.broadcast %14 : i32 to vector<1x288xi32>
    %16 = arith.remsi %12, %15 : vector<1x288xi32>
    %c0_i32_8 = arith.constant 0 : i32
    %17 = vector.broadcast %c0_i32_8 : i32 to vector<1x288xi32>
    %18 = arith.cmpi ne, %16, %17 : vector<1x288xi32>
    %c0_i32_9 = arith.constant 0 : i32
    %19 = vector.broadcast %c0_i32_9 : i32 to vector<1x288xi32>
    %20 = arith.cmpi slt, %16, %19 : vector<1x288xi32>
    %c0_i32_10 = arith.constant 0 : i32
    %21 = arith.cmpi slt, %14, %c0_i32_10 : i32
    %22 = vector.broadcast %21 : i1 to vector<1x288xi1>
    %23 = vector.broadcast %22 : vector<1x288xi1> to vector<1x288xi1>
    %24 = arith.xori %20, %23 : vector<1x288xi1>
    %25 = arith.andi %24, %18 : vector<1x288xi1>
    %26 = vector.broadcast %14 : i32 to vector<1x288xi32>
    %27 = arith.addi %16, %26 : vector<1x288xi32>
    %28 = arith.select %25, %27, %16 : vector<1x288xi1>, vector<1x288xi32>
    %c16_i32 = arith.constant 16 : i32
    %29 = vector.broadcast %c16_i32 : i32 to vector<1x288xi32>
    %30 = arith.cmpi slt, %28, %29 : vector<1x288xi32>
    %cst_11 = arith.constant 0.000000e+00 : f32
    %31 = vector.shape_cast %30 : vector<1x288xi1> to vector<1x288xi1>
    %32 = vector.broadcast %31 : vector<1x288xi1> to vector<8x288xi1>
    %33 = vector.broadcast %cst_11 : f32 to vector<8x288xf32>
    %34 = arith.select %32, %11, %33 : vector<8x288xi1>, vector<8x288xf32>
    %35 = arith.truncf %34 : vector<8x288xf32> to vector<8x288xbf16>
    %cst_12 = arith.constant 0.000000e+00 : bf16
    %36 = vector.broadcast %cst_12 : bf16 to vector<72x38xbf16>
    %c0_13 = arith.constant 0 : index
    %c0_14 = arith.constant 0 : index
    %37 = vector.load %arg8[%c0_13, %c0_14] : memref<72x326xbf16, #tpu.memory_space<vmem>>, vector<72x38xbf16>
    tpu.vector_store %arg8[%c0_13, %c0_14], %36 {strides = array<i32>} : memref<72x326xbf16, #tpu.memory_space<vmem>>, vector<72x38xbf16>,
    %c0_15 = arith.constant 0 : index
    %c288 = arith.constant 288 : index
    %38 = vector.load %arg8[%c0_15, %c288] : memref<72x326xbf16, #tpu.memory_space<vmem>>, vector<72x38xbf16>
    tpu.vector_store %arg8[%c0_15, %c288], %36 {strides = array<i32>} : memref<72x326xbf16, #tpu.memory_space<vmem>>, vector<72x38xbf16>,
    %c0_16 = arith.constant 0 : index
    %c38 = arith.constant 38 : index
    %39 = vector.load %arg8[%c0_16, %c38] : memref<72x326xbf16, #tpu.memory_space<vmem>>, vector<8x288xbf16>
    tpu.vector_store %arg8[%c0_16, %c38], %35 {strides = array<i32>} : memref<72x326xbf16, #tpu.memory_space<vmem>>, vector<8x288xbf16>,
    %c8 = arith.constant 8 : index
    %c37 = arith.constant 37 : index
    %40 = vector.load %arg8[%c8, %c37] : memref<72x326xbf16, #tpu.memory_space<vmem>>, vector<8x288xbf16>
    tpu.vector_store %arg8[%c8, %c37], %35 {strides = array<i32>} : memref<72x326xbf16, #tpu.memory_space<vmem>>, vector<8x288xbf16>,
    %c16 = arith.constant 16 : index
    %c36 = arith.constant 36 : index
    %41 = vector.load %arg8[%c16, %c36] : memref<72x326xbf16, #tpu.memory_space<vmem>>, vector<8x288xbf16>
    tpu.vector_store %arg8[%c16, %c36], %35 {strides = array<i32>} : memref<72x326xbf16, #tpu.memory_space<vmem>>, vector<8x288xbf16>,
    %c24 = arith.constant 24 : index
    %c20 = arith.constant 20 : index
    %42 = vector.load %arg8[%c24, %c20] : memref<72x326xbf16, #tpu.memory_space<vmem>>, vector<8x288xbf16>
    tpu.vector_store %arg8[%c24, %c20], %35 {strides = array<i32>} : memref<72x326xbf16, #tpu.memory_space<vmem>>, vector<8x288xbf16>,
    %c32 = arith.constant 32 : index
    %c19 = arith.constant 19 : index
    %43 = vector.load %arg8[%c32, %c19] : memref<72x326xbf16, #tpu.memory_space<vmem>>, vector<8x288xbf16>
    tpu.vector_store %arg8[%c32, %c19], %35 {strides = array<i32>} : memref<72x326xbf16, #tpu.memory_space<vmem>>, vector<8x288xbf16>,
    %c40 = arith.constant 40 : index
    %c18 = arith.constant 18 : index
    %44 = vector.load %arg8[%c40, %c18] : memref<72x326xbf16, #tpu.memory_space<vmem>>, vector<8x288xbf16>
    tpu.vector_store %arg8[%c40, %c18], %35 {strides = array<i32>} : memref<72x326xbf16, #tpu.memory_space<vmem>>, vector<8x288xbf16>,
    %c48 = arith.constant 48 : index
    %c2 = arith.constant 2 : index
    %45 = vector.load %arg8[%c48, %c2] : memref<72x326xbf16, #tpu.memory_space<vmem>>, vector<8x288xbf16>
    tpu.vector_store %arg8[%c48, %c2], %35 {strides = array<i32>} : memref<72x326xbf16, #tpu.memory_space<vmem>>, vector<8x288xbf16>,
    %c56 = arith.constant 56 : index
    %c1_17 = arith.constant 1 : index
    %46 = vector.load %arg8[%c56, %c1_17] : memref<72x326xbf16, #tpu.memory_space<vmem>>, vector<8x288xbf16>
    tpu.vector_store %arg8[%c56, %c1_17], %35 {strides = array<i32>} : memref<72x326xbf16, #tpu.memory_space<vmem>>, vector<8x288xbf16>,
    %c64 = arith.constant 64 : index
    %c0_18 = arith.constant 0 : index
    %47 = vector.load %arg8[%c64, %c0_18] : memref<72x326xbf16, #tpu.memory_space<vmem>>, vector<8x288xbf16>
    tpu.vector_store %arg8[%c64, %c0_18], %35 {strides = array<i32>} : memref<72x326xbf16, #tpu.memory_space<vmem>>, vector<8x288xbf16>,
    %c0_19 = arith.constant 0 : index
    %c19_20 = arith.constant 19 : index
    %48 = vector.load %arg8[%c0_19, %c19_20] : memref<72x326xbf16, #tpu.memory_space<vmem>>, vector<72x288xbf16>
    %c0_21 = arith.constant 0 : index
    %c0_22 = arith.constant 0 : index
    %49 = vector.load %arg3[%c0_21, %c0_22] : memref<8x72xbf16, #tpu.memory_space<vmem>>, vector<8x72xbf16>
    %cst_23 = arith.constant dense<0.000000e+00> : vector<8x288xf32>
    %50 = tpu.matmul %49, %48, %cst_23 {dimension_numbers = #tpu.dot_dimension_numbers<[1], [0], [0], [1], [0, 0, 1, 1], [], []>} : vector<8x72xbf16>, vector<72x288xbf16>, vector<8x288xf32> -> vector<8x288xf32>
    %c0_24 = arith.constant 0 : index
    %c2_25 = arith.constant 2 : index
    %51 = vector.load %arg5[%c0_24, %c2_25] : memref<8x8xf32, #tpu.memory_space<vmem>>, vector<8x1xf32>
    %52 = vector.broadcast %51 : vector<8x1xf32> to vector<8x288xf32>
    %53 = arith.mulf %50, %52 : vector<8x288xf32>
    %c0_26 = arith.constant 0 : index
    %c3 = arith.constant 3 : index
    %54 = vector.load %arg5[%c0_26, %c3] : memref<8x8xf32, #tpu.memory_space<vmem>>, vector<8x1xf32>
    %55 = vector.broadcast %54 : vector<8x1xf32> to vector<8x288xf32>
    %56 = arith.addf %53, %55 : vector<8x288xf32>
    %57 = vector.extract_strided_slice %1 {offsets = [16, 0], sizes = [4, 288], strides = [1, 1]} : vector<36x288xbf16> to vector<4x288xbf16>
    %c0_27 = arith.constant 0 : index
    %c0_28 = arith.constant 0 : index
    %58 = vector.load %arg4[%c0_27, %c0_28] : memref<8x4xbf16, #tpu.memory_space<vmem>>, vector<8x4xbf16>
    %cst_29 = arith.constant dense<0.000000e+00> : vector<8x288xf32>
    %59 = tpu.matmul %58, %57, %cst_29 {dimension_numbers = #tpu.dot_dimension_numbers<[1], [0], [0], [1], [0, 0, 1, 1], [], []>} : vector<8x4xbf16>, vector<4x288xbf16>, vector<8x288xf32> -> vector<8x288xf32>
    %c0_30 = arith.constant 0 : index
    %c4 = arith.constant 4 : index
    %60 = vector.load %arg5[%c0_30, %c4] : memref<8x8xf32, #tpu.memory_space<vmem>>, vector<8x1xf32>
    %61 = vector.broadcast %60 : vector<8x1xf32> to vector<8x288xf32>
    %62 = arith.mulf %59, %61 : vector<8x288xf32>
    %63 = arith.addf %56, %62 : vector<8x288xf32>
    %c0_31 = arith.constant 0 : index
    %c5 = arith.constant 5 : index
    %64 = vector.load %arg5[%c0_31, %c5] : memref<8x8xf32, #tpu.memory_space<vmem>>, vector<8x1xf32>
    %65 = vector.broadcast %64 : vector<8x1xf32> to vector<8x288xf32>
    %66 = arith.addf %63, %65 : vector<8x288xf32>
    %cst_32 = arith.constant 0.000000e+00 : f32
    %67 = vector.broadcast %cst_32 : f32 to vector<8x288xf32>
    %68 = arith.maximumf %66, %67 : vector<8x288xf32>
    %c0_33 = arith.constant 0 : index
    %c6 = arith.constant 6 : index
    %69 = vector.load %arg5[%c0_33, %c6] : memref<8x8xf32, #tpu.memory_space<vmem>>, vector<8x1xf32>
    %70 = vector.broadcast %69 : vector<8x1xf32> to vector<8x288xf32>
    %71 = arith.mulf %68, %70 : vector<8x288xf32>
    %cst_34 = arith.constant dense<0.000000e+00> : vector<288xf32>
    %72 = vector.multi_reduction <add>, %71, %cst_34 [0] : vector<8x288xf32> to vector<288xf32>
    %73 = vector.shape_cast %72 : vector<288xf32> to vector<1x288xf32>
    %c0_35 = arith.constant 0 : index
    %74 = memref.load %arg6[%c0_35] : memref<1xf32, #tpu.memory_space<smem>>
    %75 = vector.broadcast %74 : f32 to vector<1x288xf32>
    %76 = arith.addf %73, %75 : vector<1x288xf32>
    %77 = arith.negf %76 : vector<1x288xf32>
    %78 = math.exp %77 : vector<1x288xf32>
    %cst_36 = arith.constant 1.000000e+00 : f32
    %79 = vector.broadcast %cst_36 : f32 to vector<1x288xf32>
    %80 = arith.addf %79, %78 : vector<1x288xf32>
    %81 = arith.divf %79, %80 : vector<1x288xf32>
    %82 = vector.broadcast %81 : vector<1x288xf32> to vector<8x288xf32>
    %83 = arith.mulf %68, %82 : vector<8x288xf32>
    %c0_37 = arith.constant 0 : index
    %c0_38 = arith.constant 0 : index
    %c0_39 = arith.constant 0 : index
    %84 = vector.load %arg7[%c0_37, %c0_38, %c0_39] : memref<1x8x288xf32, #tpu.memory_space<vmem>>, vector<1x8x288xf32>
    %85 = vector.shape_cast %84 : vector<1x8x288xf32> to vector<8x288xf32>
    %86 = vector.shape_cast %83 : vector<8x288xf32> to vector<1x8x288xf32>
    tpu.vector_store %arg7[%c0_37, %c0_38, %c0_39], %86 {strides = array<i32>} : memref<1x8x288xf32, #tpu.memory_space<vmem>>, vector<1x8x288xf32>,
    return
  }
  func.func @transform_0(%arg0: i32) -> (i32, i32, i32) {
    %c0_i32 = arith.constant 0 : i32
    %c0_i32_0 = arith.constant 0 : i32
    %c0_i32_1 = arith.constant 0 : i32
    return %arg0, %c0_i32, %c0_i32_0 : i32, i32, i32
  }
  func.func @transform_1(%arg0: i32) -> (i32, i32) {
    %c0_i32 = arith.constant 0 : i32
    %c0_i32_0 = arith.constant 0 : i32
    %c0_i32_1 = arith.constant 0 : i32
    return %c0_i32, %c0_i32_0 : i32, i32
  }
  func.func @transform_2(%arg0: i32) -> (i32, i32) {
    %c0_i32 = arith.constant 0 : i32
    %c0_i32_0 = arith.constant 0 : i32
    %c0_i32_1 = arith.constant 0 : i32
    return %c0_i32, %c0_i32_0 : i32, i32
  }
  func.func @transform_3(%arg0: i32) -> (i32, i32) {
    %c0_i32 = arith.constant 0 : i32
    %c0_i32_0 = arith.constant 0 : i32
    %c0_i32_1 = arith.constant 0 : i32
    return %c0_i32, %c0_i32_0 : i32, i32
  }
  func.func @transform_4(%arg0: i32) -> (i32, i32) {
    %c0_i32 = arith.constant 0 : i32
    %c0_i32_0 = arith.constant 0 : i32
    %c0_i32_1 = arith.constant 0 : i32
    return %c0_i32, %c0_i32_0 : i32, i32
  }
  func.func @transform_5(%arg0: i32) -> i32 {
    %c0_i32 = arith.constant 0 : i32
    %c0_i32_0 = arith.constant 0 : i32
    return %c0_i32 : i32
  }
  func.func @transform_6(%arg0: i32) -> (i32, i32, i32) {
    %c0_i32 = arith.constant 0 : i32
    %c0_i32_0 = arith.constant 0 : i32
    %c0_i32_1 = arith.constant 0 : i32
    return %arg0, %c0_i32, %c0_i32_0 : i32, i32, i32
  }
}

</mosaic_0001>

<llo_original>
// kernel: basic_block_with_attention.1
$region0: #{basic_block_with_attention.1}
  #allocation0 [shape = 'u32[]', space=smem, size = 0x4, offset = 0x4, fixed_abs, tag = 'smem constant byte address 0x4 - core index']
  #allocation1 [shape = 'u32[144,128]{1,0:T(1,128)}', space=vmem, size = 0x12000, scoped, tag = 'internal scratch']
  #allocation2 [shape = 'bf16[72,326]{1,0:T(8,128)(2,1)}', space=vmem, size = 0xd800, scoped, tag = 'scratch operand']
  #allocation3 [shape = 'f32[1]{0:T(128)S(6)}', space=smem, size = 0x200, scoped, tag = 'scoped memory for basic_block_with_attention.1']
  %s0 = inlined_call_operand.vmem [shape: bf16[2,36,288], index: 0, kind: input, shape index: {}]
  %s1 = inlined_call_operand.vmem [shape: bf16[8,36], index: 1, kind: input, shape index: {}]
  %s2 = inlined_call_operand.vmem [shape: bf16[8,72], index: 2, kind: input, shape index: {}]
  %s3 = inlined_call_operand.vmem [shape: bf16[8,4], index: 3, kind: input, shape index: {}]
  %s4 = inlined_call_operand.vmem [shape: f32[8,8], index: 4, kind: input, shape index: {}]
  %s5 = inlined_call_operand.<no memory space> [shape: f32[1], index: 5, kind: input, shape index: {}]
  %s6 = inlined_call_operand.vmem [shape: f32[2,8,288], index: 6, kind: output, shape index: {}]
  %s7 = sld [smem:[#allocation0]]
  $region57: #{basic_block_with_attention.1} parent=0
    _
  %s9 = ssub.s32 1, %s7
  %s10 = scalar_select 0, %s9, %s7
  %11 = sst [smem:[#allocation3]] %s5
  loop: start=0, step=1, limit=4
  $region2: #{basic_block_with_attention.1} parent=0 // loop_pre_header
    _
  $region3: #{basic_block_with_attention.1} parent=0 // loop_header
    %s13 = sphi 0, %s17
    %p14 = scmp.ge.s32.totalorder %s13, 4
    %s23 = sphi 0, %s25
    %s26 = sphi 0, %s23
    %s27 = sphi 0, %s26
    %s43 = sphi 0, %s27
    %s47 = sphi 0, %s47
    %s49 = sphi 0, %s47
    %s50 = sphi 0, %s49
    %s64 = sphi 0, %s50
    %s68 = sphi 0, %s68
    %s70 = sphi 0, %s68
    %s71 = sphi 0, %s70
    %s85 = sphi 0, %s71
    %s89 = sphi 0, %s89
    %s91 = sphi 0, %s89
    %s92 = sphi 0, %s91
    %s106 = sphi 0, %s92
    %s110 = sphi 0, %s110
    %s112 = sphi 0, %s110
    %s113 = sphi 0, %s112
    %s127 = sphi 0, %s113
    %s131 = sphi 0, %s131
    %s133 = sphi 0, %s131
    %s134 = sphi 0, %s133
    %s148 = sphi 0, %s134
    %s154 = sphi 0, %s156
    %s157 = sphi 0, %s154
    %s158 = sphi 0, %s157
    %s174 = sphi 0, %s158
  $region4: #{basic_block_with_attention.1} parent=0 // loop_header_branch
    %16 = sbr.rel (%p14) target = $region8
  $region5: #{basic_block_with_attention.1} parent=0 // loop_body
    %s18 = ssub.s32 %s13, 1
    %s19 = ssub.s32 %s13, 2
    %s20 = sadd.s32 %s13, 1
    %s21 = ssub.s32 %s13, %s20
    %p22 = scmp.eq.s32.totalorder %s21, 0
    %s24 = sadd.s32 %s23, 1
    %s25 = scalar_select %p22, %s23, %s24
    %p28 = pneg %p22
    %p29 = scmp.eq.s32.totalorder %s13, 1
    %p30 = por %p28, %p29
    %p31 = scmp.ne.s32.totalorder %s23, %s26
    %p32 = scmp.eq.s32.totalorder %s13, 0
    %p33 = por %p31, %p32
    %p34 = scmp.ne.s32.totalorder %s23, %s26
    %p35 = scmp.eq.s32.totalorder %s18, 1
    %p36 = por %p34, %p35
    %p37 = scmp.ne.s32.totalorder %s26, %s27
    %p38 = scmp.eq.s32.totalorder %s18, 0
    %p39 = por %p37, %p38
    %p40 = scmp.ne.s32.totalorder %s26, %s27
    %p41 = scmp.eq.s32.totalorder %s19, 1
    %p42 = por %p40, %p41
    %p44 = scmp.ne.s32.totalorder %s27, %s43
    %p45 = scmp.eq.s32.totalorder %s19, 0
    %p46 = por %p44, %p45
    %s48 = sadd.s32 %s47, 1
    %p51 = scmp.eq.s32.totalorder %s13, 1
    %p52 = scmp.ne.s32.totalorder %s47, %s49
    %p53 = scmp.eq.s32.totalorder %s13, 0
    %p54 = por %p52, %p53
    %p55 = scmp.ne.s32.totalorder %s47, %s49
    %p56 = scmp.eq.s32.totalorder %s18, 1
    %p57 = por %p55, %p56
    %p58 = scmp.ne.s32.totalorder %s49, %s50
    %p59 = scmp.eq.s32.totalorder %s18, 0
    %p60 = por %p58, %p59
    %p61 = scmp.ne.s32.totalorder %s49, %s50
    %p62 = scmp.eq.s32.totalorder %s19, 1
    %p63 = por %p61, %p62
    %p65 = scmp.ne.s32.totalorder %s50, %s64
    %p66 = scmp.eq.s32.totalorder %s19, 0
    %p67 = por %p65, %p66
    %s69 = sadd.s32 %s68, 1
    %p72 = scmp.eq.s32.totalorder %s13, 1
    %p73 = scmp.ne.s32.totalorder %s68, %s70
    %p74 = scmp.eq.s32.totalorder %s13, 0
    %p75 = por %p73, %p74
    %p76 = scmp.ne.s32.totalorder %s68, %s70
    %p77 = scmp.eq.s32.totalorder %s18, 1
    %p78 = por %p76, %p77
    %p79 = scmp.ne.s32.totalorder %s70, %s71
    %p80 = scmp.eq.s32.totalorder %s18, 0
    %p81 = por %p79, %p80
    %p82 = scmp.ne.s32.totalorder %s70, %s71
    %p83 = scmp.eq.s32.totalorder %s19, 1
    %p84 = por %p82, %p83
    %p86 = scmp.ne.s32.totalorder %s71, %s85
    %p87 = scmp.eq.s32.totalorder %s19, 0
    %p88 = por %p86, %p87
    %s90 = sadd.s32 %s89, 1
    %p93 = scmp.eq.s32.totalorder %s13, 1
    %p94 = scmp.ne.s32.totalorder %s89, %s91
    %p95 = scmp.eq.s32.totalorder %s13, 0
    %p96 = por %p94, %p95
    %p97 = scmp.ne.s32.totalorder %s89, %s91
    %p98 = scmp.eq.s32.totalorder %s18, 1
    %p99 = por %p97, %p98
    %p100 = scmp.ne.s32.totalorder %s91, %s92
    %p101 = scmp.eq.s32.totalorder %s18, 0
    %p102 = por %p100, %p101
    %p103 = scmp.ne.s32.totalorder %s91, %s92
    %p104 = scmp.eq.s32.totalorder %s19, 1
    %p105 = por %p103, %p104
    %p107 = scmp.ne.s32.totalorder %s92, %s106
    %p108 = scmp.eq.s32.totalorder %s19, 0
    %p109 = por %p107, %p108
    %s111 = sadd.s32 %s110, 1
    %p114 = scmp.eq.s32.totalorder %s13, 1
    %p115 = scmp.ne.s32.totalorder %s110, %s112
    %p116 = scmp.eq.s32.totalorder %s13, 0
    %p117 = por %p115, %p116
    %p118 = scmp.ne.s32.totalorder %s110, %s112
    %p119 = scmp.eq.s32.totalorder %s18, 1
    %p120 = por %p118, %p119
    %p121 = scmp.ne.s32.totalorder %s112, %s113
    %p122 = scmp.eq.s32.totalorder %s18, 0
    %p123 = por %p121, %p122
    %p124 = scmp.ne.s32.totalorder %s112, %s113
    %p125 = scmp.eq.s32.totalorder %s19, 1
    %p126 = por %p124, %p125
    %p128 = scmp.ne.s32.totalorder %s113, %s127
    %p129 = scmp.eq.s32.totalorder %s19, 0
    %p130 = por %p128, %p129
    %s132 = sadd.s32 %s131, 1
    %p135 = scmp.eq.s32.totalorder %s13, 1
    %p136 = scmp.ne.s32.totalorder %s131, %s133
    %p137 = scmp.eq.s32.totalorder %s13, 0
    %p138 = por %p136, %p137
    %p139 = scmp.ne.s32.totalorder %s131, %s133
    %p140 = scmp.eq.s32.totalorder %s18, 1
    %p141 = por %p139, %p140
    %p142 = scmp.ne.s32.totalorder %s133, %s134
    %p143 = scmp.eq.s32.totalorder %s18, 0
    %p144 = por %p142, %p143
    %p145 = scmp.ne.s32.totalorder %s133, %s134
    %p146 = scmp.eq.s32.totalorder %s19, 1
    %p147 = por %p145, %p146
    %p149 = scmp.ne.s32.totalorder %s134, %s148
    %p150 = scmp.eq.s32.totalorder %s19, 0
    %p151 = por %p149, %p150
    %s152 = ssub.s32 %s13, %s20
    %p153 = scmp.eq.s32.totalorder %s152, 0
    %s155 = sadd.s32 %s154, 1
    %s156 = scalar_select %p153, %s154, %s155
    %p159 = pneg %p153
    %p160 = scmp.eq.s32.totalorder %s13, 1
    %p161 = por %p159, %p160
    %p162 = scmp.ne.s32.totalorder %s154, %s157
    %p163 = scmp.eq.s32.totalorder %s13, 0
    %p164 = por %p162, %p163
    %p165 = scmp.ne.s32.totalorder %s154, %s157
    %p166 = scmp.eq.s32.totalorder %s18, 1
    %p167 = por %p165, %p166
    %p168 = scmp.ne.s32.totalorder %s157, %s158
    %p169 = scmp.eq.s32.totalorder %s18, 0
    %p170 = por %p168, %p169
    %p171 = scmp.ne.s32.totalorder %s157, %s158
    %p172 = scmp.eq.s32.totalorder %s19, 1
    %p173 = por %p171, %p172
    %p175 = scmp.ne.s32.totalorder %s158, %s174
    %p176 = scmp.eq.s32.totalorder %s19, 0
    %p177 = por %p175, %p176
    %p178 = scmp.le.s32.totalorder 1, %s13
    %p179 = scmp.lt.s32.totalorder %s13, 3
    %p180 = pnand %p178, %p179
    %p181 = pneg %p180
    // Predicated region
    $region9: #{basic_block_with_attention.1} parent=5 // pred_check
      _
    $region10: #{basic_block_with_attention.1} parent=5 // pred_check_branch
      %183 = sbr.rel (%p180) target = $region12
    $region11: #{basic_block_with_attention.1} parent=5 // pred_region
      %s184 = ssub.s32 %s13, 1
      // Predicated region
      $region13: #{basic_block_with_attention.1} parent=11 // pred_check
        %p185 = pneg %p60
      $region14: #{basic_block_with_attention.1} parent=11 // pred_check_branch
        %187 = sbr.rel (%p185) target = $region16
      $region15: #{basic_block_with_attention.1} parent=11 // pred_region
        _
      $region16: #{basic_block_with_attention.1} parent=11 // pred_fallthru
        _
      // Predicated region
      $region17: #{basic_block_with_attention.1} parent=11 // pred_check
        %p188 = pneg %p81
      $region18: #{basic_block_with_attention.1} parent=11 // pred_check_branch
        %190 = sbr.rel (%p188) target = $region20
      $region19: #{basic_block_with_attention.1} parent=11 // pred_region
        _
      $region20: #{basic_block_with_attention.1} parent=11 // pred_fallthru
        _
      // Predicated region
      $region21: #{basic_block_with_attention.1} parent=11 // pred_check
        %p191 = pneg %p102
      $region22: #{basic_block_with_attention.1} parent=11 // pred_check_branch
        %193 = sbr.rel (%p191) target = $region24
      $region23: #{basic_block_with_attention.1} parent=11 // pred_region
        _
      $region24: #{basic_block_with_attention.1} parent=11 // pred_fallthru
        _
      // Predicated region
      $region25: #{basic_block_with_attention.1} parent=11 // pred_check
        %p194 = pneg %p123
      $region26: #{basic_block_with_attention.1} parent=11 // pred_check_branch
        %196 = sbr.rel (%p194) target = $region28
      $region27: #{basic_block_with_attention.1} parent=11 // pred_region
        _
      $region28: #{basic_block_with_attention.1} parent=11 // pred_fallthru
        _
      // Predicated region
      $region29: #{basic_block_with_attention.1} parent=11 // pred_check
        %p197 = pneg %p144
      $region30: #{basic_block_with_attention.1} parent=11 // pred_check_branch
        %199 = sbr.rel (%p197) target = $region32
      $region31: #{basic_block_with_attention.1} parent=11 // pred_region
        _
      $region32: #{basic_block_with_attention.1} parent=11 // pred_fallthru
        _
    $region12: #{basic_block_with_attention.1} parent=5 // pred_fallthru
      _
    %p200 = scmp.lt.s32.totalorder %s13, 2
    // Predicated region
    $region33: #{basic_block_with_attention.1} parent=5 // pred_check
      %p201 = pneg %p200
    $region34: #{basic_block_with_attention.1} parent=5 // pred_check_branch
      %203 = sbr.rel (%p201) target = $region36
    $region35: #{basic_block_with_attention.1} parent=5 // pred_region
      // Predicated region
      $region37: #{basic_block_with_attention.1} parent=35 // pred_check
        %p204 = pneg %p33
      $region38: #{basic_block_with_attention.1} parent=35 // pred_check_branch
        %206 = sbr.rel (%p204) target = $region40
      $region39: #{basic_block_with_attention.1} parent=35 // pred_region
        %p207 = scmp.lt.s32.totalorder %s13, 1
        %s208 = scalar_select %p207, %s13, 1
        %s209 = smul.addr %s208, 15
        %s210 = smul.addr %s209, 4
        %s211 = scalar_lea.vmem %s0, %s210
      $region40: #{basic_block_with_attention.1} parent=35 // pred_fallthru
        _
    $region36: #{basic_block_with_attention.1} parent=5 // pred_fallthru
      _
    %p212 = scmp.le.s32.totalorder 1, %s13
    %p213 = scmp.lt.s32.totalorder %s13, 3
    %p214 = pnand %p212, %p213
    %p215 = pneg %p214
    // Predicated region
    $region41: #{basic_block_with_attention.1} parent=5 // pred_check
      _
    $region42: #{basic_block_with_attention.1} parent=5 // pred_check_branch
      %217 = sbr.rel (%p214) target = $region44
    $region43: #{basic_block_with_attention.1} parent=5 // pred_region
      %s218 = ssub.s32 %s13, 1
      %p219 = scmp.lt.s32.totalorder %s18, 1
      %s220 = scalar_select %p219, %s18, 1
      %s221 = smul.addr %s220, 15
      %s222 = smul.addr %s221, 4
      %s223 = scalar_lea.vmem %s0, %s222
      %p224 = pneg %p39
      %p225 = pneg %p36
      %p226 = pneg %p60
      %p227 = pneg %p57
      %p228 = pneg %p81
      %p229 = pneg %p78
      %p230 = pneg %p102
      %p231 = pneg %p99
      %p232 = pneg %p123
      %p233 = pneg %p120
      %p234 = pneg %p144
      %p235 = pneg %p141
      %p236 = pneg %p170
      %p237 = pneg %p167
      %p238 = scmp.lt.s32.totalorder %s18, 1
      %s239 = scalar_select %p238, %s18, 1
      %s240 = smul.addr %s239, 3
      %s241 = smul.addr %s240, 8
      %s242 = scalar_lea.vmem %s6, %s241
      %p243 = scmp.lt.s32.totalorder %s18, 1
      %s244 = scalar_select %p243, %s18, 1
      %s245 = smul.addr %s244, 15
      %s246 = smul.addr %s245, 4
      %s247 = scalar_lea.vmem %s0, %s246
      %p248 = scmp.lt.s32.totalorder %s18, 1
      %s249 = scalar_select %p248, %s18, 1
      %s250 = smul.addr %s249, 3
      %s251 = smul.addr %s250, 8
      %s252 = scalar_lea.vmem %s6, %s251
      %v254 = vld [vmem:[%s247] sm:$0xff]
      %v255 = vld [vmem:[%s247 + $0x8] sm:$0xf]
      %v256 = vld [vmem:[%s247 + $0xc] sm:$0xff]
      %v257 = vld [vmem:[%s247 + $0x14] sm:$0xf]
      %v258 = vld [vmem:[%s247 + $0x18] sm:$0xff]
      %v259 = vld [vmem:[%s247 + $0x20] sm:$0xf]
      %v260 = vld [vmem:[%s247 + $0x24] sm:$0xff]
      %v261 = vld [vmem:[%s247 + $0x2c] sm:$0xf]
      %v262 = vld [vmem:[%s247 + $0x30] sm:$0x33]
      %v263 = vld [vmem:[%s247 + $0x38] sm:$0x3]
      %v264 = vld [vmem:[%s1] sm:$0xf]
      %v275 = vunpack.c.l.b16 %v254
      %v276 = vunpack.c.h.b16 %v254
      %v277 = vunpack.c.l.b16 %v255
      %v278 = vunpack.c.l.b16 %v256
      %v279 = vunpack.c.h.b16 %v256
      %v280 = vunpack.c.l.b16 %v257
      %v281 = vunpack.c.l.b16 %v258
      %v282 = vunpack.c.h.b16 %v258
      %v283 = vunpack.c.l.b16 %v259
      %v284 = vunpack.c.l.b16 %v260
      %v285 = vunpack.c.h.b16 %v260
      %v286 = vunpack.c.l.b16 %v261
      %v287 = vunpack.c.l.b16 %v262
      %v288 = vunpack.c.h.b16 %v262
      %v289 = vunpack.c.l.b16 %v263
      %v290 = vpack.c.b16 %v278, %v275
      %v291 = vpack.c.b16 %v279, %v276
      %v292 = vpack.c.b16 %v280, %v277
      %v293 = vpack.c.b16 %v284, %v281
      %v294 = vpack.c.b16 %v285, %v282
      %v295 = vpack.c.b16 %v286, %v283
      %v296 = vpack.c.b16 %v287, %v287
      %v297 = vpack.c.b16 %v288, %v288
      %v298 = vpack.c.b16 %v289, %v289
      %vm305 = vcmask 293888
      %v307 = vsel %vm305, %v264, 0
      %vm309 = vcmask 1041408
      %v311 = vsel %vm309, %v296, 0
      %v314 = vsel %vm309, %v297, 0
      %v317 = vsel %vm309, %v298, 0
      %319 = vmatprep.subr.bf16.mxu0 %v291
      %320 = vmatpush1.bf16.msra.mxu0 %v290
      %321 = vmatprep.subr.bf16.mxu0 %v294
      %322 = vmatpush1.bf16.msra.mxu0 %v293
      %323 = vmatprep.subr.bf16.mxu0 %v314
      %324 = vmatpush1.bf16.msra.mxu0 %v311
      %325 = vmatprep.subr.bf16.mxu0 0
      %326 = vmatpush1.bf16.msra.mxu0 0
      %327 = vmatprep.subr.bf16.mxu0 0
      %328 = vmatpush1.bf16.msra.mxu0 0
      %329 = vmatprep.subr.bf16.mxu0 0
      %330 = vmatpush1.bf16.msra.mxu0 0
      %331 = vmatprep.subr.bf16.mxu0 0
      %332 = vmatpush1.bf16.msra.mxu0 0
      %333 = vmatprep.subr.bf16.mxu0 0
      %334 = vmatpush1.bf16.msra.mxu0 0
      %335 = vmatprep.subr.bf16.mxu0 0
      %336 = vmatpush1.bf16.msra.mxu0 0
      %337 = vmatprep.subr.bf16.mxu0 0
      %338 = vmatpush1.bf16.msra.mxu0 0
      %339 = vmatprep.subr.bf16.mxu0 0
      %340 = vmatpush1.bf16.msra.mxu0 0
      %341 = vmatprep.subr.bf16.mxu0 0
      %342 = vmatpush1.bf16.msra.mxu0 0
      %343 = vmatprep.subr.bf16.mxu0 0
      %344 = vmatpush1.bf16.msra.mxu0 0
      %345 = vmatprep.subr.bf16.mxu0 0
      %346 = vmatpush1.bf16.msra.mxu0 0
      %347 = vmatprep.subr.bf16.mxu0 0
      %348 = vmatpush1.bf16.msra.mxu0 0
      %349 = vmatprep.subr.bf16.mxu0 0
      %350 = vmatpush1.bf16.msra.mxu0 0
      %351 = vmatprep.mubr.bf16.mxu0 0
      %352 = vmatmul.mubr.bf16.gmra.mrb[0].mxu0 %v307
      %v353 = vpop.f32.mrb[0].mxu0
      %v354 = vadd.f32 0.0, %v353
      %v355 = vpop.f32.mrb[0].mxu0
      %v356 = vadd.f32 0.0, %v355
      %v357 = vpop.f32.mrb[0].mxu0
      %v358 = vpop.f32.mrb[0].mxu0
      %359 = vdwg.mxu0
      %360 = vmatprep.subr.bf16.mxu0 0
      %361 = vmatpush1.bf16.msra.mxu0 %v292
      %362 = vmatprep.subr.bf16.mxu0 0
      %363 = vmatpush1.bf16.msra.mxu0 %v295
      %364 = vmatprep.subr.bf16.mxu0 0
      %365 = vmatpush1.bf16.msra.mxu0 %v317
      %366 = vmatprep.subr.bf16.mxu0 0
      %367 = vmatpush1.bf16.msra.mxu0 0
      %368 = vmatprep.subr.bf16.mxu0 0
      %369 = vmatpush1.bf16.msra.mxu0 0
      %370 = vmatprep.subr.bf16.mxu0 0
      %371 = vmatpush1.bf16.msra.mxu0 0
      %372 = vmatprep.subr.bf16.mxu0 0
      %373 = vmatpush1.bf16.msra.mxu0 0
      %374 = vmatprep.subr.bf16.mxu0 0
      %375 = vmatpush1.bf16.msra.mxu0 0
      %376 = vmatprep.subr.bf16.mxu0 0
      %377 = vmatpush1.bf16.msra.mxu0 0
      %378 = vmatprep.subr.bf16.mxu0 0
      %379 = vmatpush1.bf16.msra.mxu0 0
      %380 = vmatprep.subr.bf16.mxu0 0
      %381 = vmatpush1.bf16.msra.mxu0 0
      %382 = vmatprep.subr.bf16.mxu0 0
      %383 = vmatpush1.bf16.msra.mxu0 0
      %384 = vmatprep.subr.bf16.mxu0 0
      %385 = vmatpush1.bf16.msra.mxu0 0
      %386 = vmatprep.subr.bf16.mxu0 0
      %387 = vmatpush1.bf16.msra.mxu0 0
      %388 = vmatprep.subr.bf16.mxu0 0
      %389 = vmatpush1.bf16.msra.mxu0 0
      %390 = vmatprep.subr.bf16.mxu0 0
      %391 = vmatpush1.bf16.msra.mxu0 0
      %392 = vmatprep.mubr.bf16.mxu0 0
      %393 = vmatmul.mubr.bf16.gmra.mrb[0].mxu0 %v307
      %v394 = vpop.f32.mrb[0].mxu0
      %v395 = vadd.f32 0.0, %v394
      %v396 = vpop.f32.mrb[0].mxu0
      %v397 = vpop.f32.mrb[0].mxu0
      %v398 = vpop.f32.mrb[0].mxu0
      %399 = vdwg.mxu0
      %v400 = vld [vmem:[%s4] sm:$0xff]
      %402 = vset.pattern.permute.xlu0 0
      %403 = vperm.xlu0 %402, %v400
      %v404 = vpop.permute.xlu0 %403
      %v406 = vmul.f32 %v354, %v404
      %v407 = vmul.f32 %v356, %v404
      %v408 = vmul.f32 %v395, %v404
      %409 = vset.pattern.permute.xlu0 1
      %410 = vperm.xlu0 %409, %v400
      %v411 = vpop.permute.xlu0 %410
      %v413 = vadd.f32 %v406, %v411
      %v414 = vadd.f32 %v407, %v411
      %v415 = vadd.f32 %v408, %v411
      %v416 = vmax.f32 %v413, 0.0
      %v417 = vmax.f32 %v414, 0.0
      %v418 = vmax.f32 %v415, 0.0
      %v419 = vlaneseq
      %v420 = vand.u32 %v419, 127
      %v421 = vadd.s32 %v420, 128
      %v422 = vadd.s32 %v420, 256
      %vm423 = vcmp.lt.s32.totalorder %v420, 0
      %v424 = vsub.s32 0, %v420
      %v425 = vsel %vm423, %v424, %v420
      %v426 = vmul.u32.u64.compose %v425, 3817748708
      %v427 = vextract.low.u32 %v426
      %v428 = vextract.high.u32 %v426
      %v429 = vshrl.u32 %v428, 4
      %v430 = vmul.u32 %v429, 18
      %v431 = vsub.s32 %v425, %v430
      %v432 = vsub.s32 0, %v431
      %v433 = vsel %vm423, %v432, %v431
      %vm434 = vcmp.lt.s32.totalorder %v421, 0
      %v435 = vsub.s32 0, %v421
      %v436 = vsel %vm434, %v435, %v421
      %v437 = vmul.u32.u64.compose %v436, 3817748708
      %v438 = vextract.low.u32 %v437
      %v439 = vextract.high.u32 %v437
      %v440 = vshrl.u32 %v439, 4
      %v441 = vmul.u32 %v440, 18
      %v442 = vsub.s32 %v436, %v441
      %v443 = vsub.s32 0, %v442
      %v444 = vsel %vm434, %v443, %v442
      %vm445 = vcmp.lt.s32.totalorder %v422, 0
      %v446 = vsub.s32 0, %v422
      %v447 = vsel %vm445, %v446, %v422
      %v448 = vmul.u32.u64.compose %v447, 3817748708
      %v449 = vextract.low.u32 %v448
      %v450 = vextract.high.u32 %v448
      %v451 = vshrl.u32 %v450, 4
      %v452 = vmul.u32 %v451, 18
      %v453 = vsub.s32 %v447, %v452
      %v454 = vsub.s32 0, %v453
      %v455 = vsel %vm445, %v454, %v453
      %vm456 = vcmp.ne.s32.totalorder %v433, 0
      %vm457 = vcmp.ne.s32.totalorder %v444, 0
      %vm458 = vcmp.ne.s32.totalorder %v455, 0
      %vm459 = vcmp.lt.s32.totalorder %v433, 0
      %vm460 = vcmp.lt.s32.totalorder %v444, 0
      %vm461 = vcmp.lt.s32.totalorder %v455, 0
      %vm462 = vmand %vm459, %vm456
      %vm463 = vmand %vm460, %vm457
      %vm464 = vmand %vm461, %vm458
      %v465 = vadd.s32 %v433, 18
      %v466 = vadd.s32 %v444, 18
      %v467 = vadd.s32 %v455, 18
      %v468 = vsel %vm462, %v465, %v433
      %v469 = vsel %vm463, %v466, %v444
      %v470 = vsel %vm464, %v467, %v455
      %vm471 = vcmp.lt.s32.totalorder %v468, 16
      %vm472 = vcmp.lt.s32.totalorder %v469, 16
      %vm473 = vcmp.lt.s32.totalorder %v470, 16
      %v474 = vsel %vm471, 1, 0
      %v475 = vsel %vm472, 1, 0
      %v476 = vsel %vm473, 1, 0
      %vm477 = vcmp.eq.s32.totalorder %v474, 1
      %vm478 = vcmp.eq.s32.totalorder %v475, 1
      %vm479 = vcmp.eq.s32.totalorder %v476, 1
      %v480 = vsel %vm477, %v416, 0.0
      %v481 = vsel %vm478, %v417, 0.0
      %v482 = vsel %vm479, %v418, 0.0
      %v483 = vpack.c.bf16 %v480, %v480
      %v484 = vpack.c.bf16 %v481, %v481
      %v485 = vpack.c.bf16 %v482, %v482
      %vm486 = vcmask 306176
      %487 = vst.msk [vmem:[#allocation2] sm:$0xf] %vm486, 0
      %488 = vst.msk [vmem:[#allocation2 + $0xc] sm:$0xf] %vm486, 0
      %489 = vst.msk [vmem:[#allocation2 + $0x18] sm:$0xf] %vm486, 0
      %490 = vst.msk [vmem:[#allocation2 + $0x24] sm:$0xf] %vm486, 0
      %491 = vst.msk [vmem:[#allocation2 + $0x30] sm:$0xf] %vm486, 0
      %492 = vst.msk [vmem:[#allocation2 + $0x3c] sm:$0xf] %vm486, 0
      %493 = vst.msk [vmem:[#allocation2 + $0x48] sm:$0xf] %vm486, 0
      %494 = vst.msk [vmem:[#allocation2 + $0x54] sm:$0xf] %vm486, 0
      %495 = vst.msk [vmem:[#allocation2 + $0x60] sm:$0xf] %vm486, 0
      %vm496 = vcmask 568576
      %497 = vst.msk [vmem:[#allocation2 + $0x8] sm:$0xf] %vm496, 0
      %498 = vst.msk [vmem:[#allocation2 + $0x14] sm:$0xf] %vm496, 0
      %499 = vst.msk [vmem:[#allocation2 + $0x20] sm:$0xf] %vm496, 0
      %500 = vst.msk [vmem:[#allocation2 + $0x2c] sm:$0xf] %vm496, 0
      %501 = vst.msk [vmem:[#allocation2 + $0x38] sm:$0xf] %vm496, 0
      %502 = vst.msk [vmem:[#allocation2 + $0x44] sm:$0xf] %vm496, 0
      %503 = vst.msk [vmem:[#allocation2 + $0x50] sm:$0xf] %vm496, 0
      %504 = vst.msk [vmem:[#allocation2 + $0x5c] sm:$0xf] %vm496, 0
      %505 = vst.msk [vmem:[#allocation2 + $0x68] sm:$0xf] %vm496, 0
      %v509 = vunpack.c.l.b16 %v483
      %v510 = vunpack.c.l.b16 %v484
      %v511 = vunpack.c.l.b16 %v485
      %v512 = vpack.c.b16 %v510, %v509
      %v513 = vpack.c.b16 %v511, %v511
      %514 = vrot.lane.b32.xlu0 %v512, 38
      %v515 = vpop.permute.xlu0 %514
      %516 = vrot.lane.b32.xlu0 %v513, 38
      %v517 = vpop.permute.xlu0 %516
      %v518 = vrot.slane %v515, 4
      %vm519 = vcmask 310272
      %v520 = vsel %vm519, %v518, %v515
      %v521 = vsel %vm519, %v518, %v517
      %vm524 = vcmask 1043760
      %vm525 = vcmask 1047556
      %vm526 = vmor %vm525, %vm524
      %527 = vst.msk [vmem:[#allocation2] sm:$0xff] %vm526, %v520
      %vm528 = vcmask 568320
      %529 = vst.msk [vmem:[#allocation2 + $0x8] sm:$0xf] %vm528, %v521
      %530 = vrot.lane.b32.xlu0 %v512, 37
      %v531 = vpop.permute.xlu0 %530
      %532 = vrot.lane.b32.xlu0 %v513, 37
      %v533 = vpop.permute.xlu0 %532
      %v534 = vrot.slane %v531, 4
      %vm535 = vcmask 302080
      %v536 = vsel %vm535, %v534, %v531
      %v537 = vsel %vm535, %v534, %v533
      %vm540 = vcmask 1043752
      %vm541 = vmor %vm525, %vm540
      %542 = vst.msk [vmem:[#allocation2 + $0xc] sm:$0xff] %vm541, %v536
      %vm543 = vcmask 560128
      %544 = vst.msk [vmem:[#allocation2 + $0x14] sm:$0xf] %vm543, %v537
      %545 = vrot.lane.b32.xlu0 %v512, 36
      %v546 = vpop.permute.xlu0 %545
      %547 = vrot.lane.b32.xlu0 %v513, 36
      %v548 = vpop.permute.xlu0 %547
      %v549 = vrot.slane %v546, 4
      %vm550 = vcmask 293888
      %v551 = vsel %vm550, %v549, %v546
      %v552 = vsel %vm550, %v549, %v548
      %vm555 = vcmask 1043744
      %vm556 = vmor %vm525, %vm555
      %557 = vst.msk [vmem:[#allocation2 + $0x18] sm:$0xff] %vm556, %v551
      %vm558 = vcmask 551936
      %559 = vst.msk [vmem:[#allocation2 + $0x20] sm:$0xf] %vm558, %v552
      %560 = vrot.lane.b32.xlu0 %v512, 20
      %v561 = vpop.permute.xlu0 %560
      %562 = vrot.lane.b32.xlu0 %v513, 20
      %v563 = vpop.permute.xlu0 %562
      %v564 = vrot.slane %v561, 4
      %vm565 = vcmask 162816
      %v566 = vsel %vm565, %v564, %v561
      %v567 = vsel %vm565, %v564, %v563
      %vm570 = vcmask 1043616
      %vm571 = vmor %vm525, %vm570
      %572 = vst.msk [vmem:[#allocation2 + $0x24] sm:$0xff] %vm571, %v566
      %vm573 = vcmask 420864
      %574 = vst.msk [vmem:[#allocation2 + $0x2c] sm:$0xf] %vm573, %v567
      %575 = vrot.lane.b32.xlu0 %v512, 19
      %v576 = vpop.permute.xlu0 %575
      %577 = vrot.lane.b32.xlu0 %v513, 19
      %v578 = vpop.permute.xlu0 %577
      %v579 = vrot.slane %v576, 4
      %vm580 = vcmask 154624
      %v581 = vsel %vm580, %v579, %v576
      %v582 = vsel %vm580, %v579, %v578
      %vm585 = vcmask 1043608
      %vm586 = vmor %vm525, %vm585
      %587 = vst.msk [vmem:[#allocation2 + $0x30] sm:$0xff] %vm586, %v581
      %vm588 = vcmask 412672
      %589 = vst.msk [vmem:[#allocation2 + $0x38] sm:$0xf] %vm588, %v582
      %590 = vrot.lane.b32.xlu0 %v512, 18
      %v591 = vpop.permute.xlu0 %590
      %592 = vrot.lane.b32.xlu0 %v513, 18
      %v593 = vpop.permute.xlu0 %592
      %v594 = vrot.slane %v591, 4
      %vm595 = vcmask 146432
      %v596 = vsel %vm595, %v594, %v591
      %v597 = vsel %vm595, %v594, %v593
      %vm600 = vcmask 1043600
      %vm601 = vmor %vm525, %vm600
      %602 = vst.msk [vmem:[#allocation2 + $0x3c] sm:$0xff] %vm601, %v596
      %vm603 = vcmask 404480
      %604 = vst.msk [vmem:[#allocation2 + $0x44] sm:$0xf] %vm603, %v597
      %605 = vrot.lane.b32.xlu0 %v512, 2
      %v606 = vpop.permute.xlu0 %605
      %607 = vrot.lane.b32.xlu0 %v513, 2
      %v608 = vpop.permute.xlu0 %607
      %v609 = vrot.slane %v606, 4
      %vm610 = vcmask 15360
      %v611 = vsel %vm610, %v609, %v606
      %v612 = vsel %vm610, %v609, %v608
      %vm615 = vcmask 1043472
      %vm616 = vmor %vm525, %vm615
      %617 = vst.msk [vmem:[#allocation2 + $0x48] sm:$0xff] %vm616, %v611
      %vm618 = vcmask 273408
      %619 = vst.msk [vmem:[#allocation2 + $0x50] sm:$0xf] %vm618, %v612
      %620 = vrot.lane.b32.xlu0 %v512, 1
      %v621 = vpop.permute.xlu0 %620
      %622 = vrot.lane.b32.xlu0 %v513, 1
      %v623 = vpop.permute.xlu0 %622
      %v624 = vrot.slane %v621, 4
      %vm625 = vcmask 7168
      %v626 = vsel %vm625, %v624, %v621
      %v627 = vsel %vm625, %v624, %v623
      %vm630 = vcmask 1043464
      %vm631 = vmor %vm525, %vm630
      %632 = vst.msk [vmem:[#allocation2 + $0x54] sm:$0xff] %vm631, %v626
      %vm633 = vcmask 265216
      %634 = vst.msk [vmem:[#allocation2 + $0x5c] sm:$0xf] %vm633, %v627
      %637 = vst [vmem:[#allocation2 + $0x60] sm:$0xff] %v512
      %vm638 = vcmask 257024
      %639 = vst.msk [vmem:[#allocation2 + $0x68] sm:$0xf] %vm638, %v513
      %v640 = vld [vmem:[#allocation2] sm:$0xff]
      %v641 = vld [vmem:[#allocation2 + $0x8] sm:$0xf]
      %v642 = vld [vmem:[#allocation2 + $0xc] sm:$0xff]
      %v643 = vld [vmem:[#allocation2 + $0x14] sm:$0xf]
      %v644 = vld [vmem:[#allocation2 + $0x18] sm:$0xff]
      %v645 = vld [vmem:[#allocation2 + $0x20] sm:$0xf]
      %v646 = vld [vmem:[#allocation2 + $0x24] sm:$0xff]
      %v647 = vld [vmem:[#allocation2 + $0x2c] sm:$0xf]
      %v648 = vld [vmem:[#allocation2 + $0x30] sm:$0xff]
      %v649 = vld [vmem:[#allocation2 + $0x38] sm:$0xf]
      %v650 = vld [vmem:[#allocation2 + $0x3c] sm:$0xff]
      %v651 = vld [vmem:[#allocation2 + $0x44] sm:$0xf]
      %v652 = vld [vmem:[#allocation2 + $0x48] sm:$0xff]
      %v653 = vld [vmem:[#allocation2 + $0x50] sm:$0xf]
      %v654 = vld [vmem:[#allocation2 + $0x54] sm:$0xff]
      %v655 = vld [vmem:[#allocation2 + $0x5c] sm:$0xf]
      %v656 = vld [vmem:[#allocation2 + $0x60] sm:$0xff]
      %v657 = vld [vmem:[#allocation2 + $0x68] sm:$0xf]
      %v658 = vld [vmem:[%s2] sm:$0xf]
      %v677 = vunpack.c.l.b16 %v640
      %v678 = vunpack.c.h.b16 %v640
      %v679 = vunpack.c.l.b16 %v641
      %v680 = vunpack.c.l.b16 %v642
      %v681 = vunpack.c.h.b16 %v642
      %v682 = vunpack.c.l.b16 %v643
      %v683 = vunpack.c.l.b16 %v644
      %v684 = vunpack.c.h.b16 %v644
      %v685 = vunpack.c.l.b16 %v645
      %v686 = vunpack.c.l.b16 %v646
      %v687 = vunpack.c.h.b16 %v646
      %v688 = vunpack.c.l.b16 %v647
      %v689 = vunpack.c.l.b16 %v648
      %v690 = vunpack.c.h.b16 %v648
      %v691 = vunpack.c.l.b16 %v649
      %v692 = vunpack.c.l.b16 %v650
      %v693 = vunpack.c.h.b16 %v650
      %v694 = vunpack.c.l.b16 %v651
      %v695 = vunpack.c.l.b16 %v652
      %v696 = vunpack.c.h.b16 %v652
      %v697 = vunpack.c.l.b16 %v653
      %v698 = vunpack.c.l.b16 %v654
      %v699 = vunpack.c.h.b16 %v654
      %v700 = vunpack.c.l.b16 %v655
      %v701 = vunpack.c.l.b16 %v656
      %v702 = vunpack.c.h.b16 %v656
      %v703 = vunpack.c.l.b16 %v657
      %v704 = vpack.c.b16 %v680, %v677
      %v705 = vpack.c.b16 %v681, %v678
      %v706 = vpack.c.b16 %v682, %v679
      %v707 = vpack.c.b16 %v686, %v683
      %v708 = vpack.c.b16 %v687, %v684
      %v709 = vpack.c.b16 %v688, %v685
      %v710 = vpack.c.b16 %v692, %v689
      %v711 = vpack.c.b16 %v693, %v690
      %v712 = vpack.c.b16 %v694, %v691
      %v713 = vpack.c.b16 %v698, %v695
      %v714 = vpack.c.b16 %v699, %v696
      %v715 = vpack.c.b16 %v700, %v697
      %v716 = vpack.c.b16 %v701, %v701
      %v717 = vpack.c.b16 %v702, %v702
      %v718 = vpack.c.b16 %v703, %v703
      %719 = vrot.lane.b32.xlu0 %v704, 109
      %v720 = vpop.permute.xlu0 %719
      %721 = vrot.lane.b32.xlu0 %v705, 109
      %v722 = vpop.permute.xlu0 %721
      %723 = vrot.lane.b32.xlu0 %v706, 109
      %v724 = vpop.permute.xlu0 %723
      %725 = vrot.lane.b32.xlu0 %v707, 109
      %v726 = vpop.permute.xlu0 %725
      %727 = vrot.lane.b32.xlu0 %v708, 109
      %v728 = vpop.permute.xlu0 %727
      %729 = vrot.lane.b32.xlu0 %v709, 109
      %v730 = vpop.permute.xlu0 %729
      %731 = vrot.lane.b32.xlu0 %v710, 109
      %v732 = vpop.permute.xlu0 %731
      %733 = vrot.lane.b32.xlu0 %v711, 109
      %v734 = vpop.permute.xlu0 %733
      %735 = vrot.lane.b32.xlu0 %v712, 109
      %v736 = vpop.permute.xlu0 %735
      %737 = vrot.lane.b32.xlu0 %v713, 109
      %v738 = vpop.permute.xlu0 %737
      %739 = vrot.lane.b32.xlu0 %v714, 109
      %v740 = vpop.permute.xlu0 %739
      %741 = vrot.lane.b32.xlu0 %v715, 109
      %v742 = vpop.permute.xlu0 %741
      %743 = vrot.lane.b32.xlu0 %v716, 109
      %v744 = vpop.permute.xlu0 %743
      %745 = vrot.lane.b32.xlu0 %v717, 109
      %v746 = vpop.permute.xlu0 %745
      %747 = vrot.lane.b32.xlu0 %v718, 109
      %v748 = vpop.permute.xlu0 %747
      %vm749 = vcmask 891904
      %v750 = vsel %vm749, %v720, %v722
      %v751 = vsel %vm749, %v722, %v724
      %v752 = vsel %vm749, %v726, %v728
      %v753 = vsel %vm749, %v728, %v730
      %v754 = vsel %vm749, %v732, %v734
      %v755 = vsel %vm749, %v734, %v736
      %v756 = vsel %vm749, %v738, %v740
      %v757 = vsel %vm749, %v740, %v742
      %v758 = vsel %vm749, %v744, %v746
      %v759 = vsel %vm749, %v746, %v748
      %vm772 = vcmask 588800
      %v774 = vsel %vm772, %v658, 0
      %vm776 = vcmask 1043456
      %v778 = vsel %vm776, %v758, 0
      %v781 = vsel %vm776, %v759, 0
      %v784 = vsel %vm776, %v748, 0
      %786 = vmatprep.subr.bf16.mxu0 %v751
      %787 = vmatpush1.bf16.msra.mxu0 %v750
      %788 = vmatprep.subr.bf16.mxu0 %v753
      %789 = vmatpush1.bf16.msra.mxu0 %v752
      %790 = vmatprep.subr.bf16.mxu0 %v755
      %791 = vmatpush1.bf16.msra.mxu0 %v754
      %792 = vmatprep.subr.bf16.mxu0 %v757
      %793 = vmatpush1.bf16.msra.mxu0 %v756
      %794 = vmatprep.subr.bf16.mxu0 %v781
      %795 = vmatpush1.bf16.msra.mxu0 %v778
      %796 = vmatprep.subr.bf16.mxu0 0
      %797 = vmatpush1.bf16.msra.mxu0 0
      %798 = vmatprep.subr.bf16.mxu0 0
      %799 = vmatpush1.bf16.msra.mxu0 0
      %800 = vmatprep.subr.bf16.mxu0 0
      %801 = vmatpush1.bf16.msra.mxu0 0
      %802 = vmatprep.subr.bf16.mxu0 0
      %803 = vmatpush1.bf16.msra.mxu0 0
      %804 = vmatprep.subr.bf16.mxu0 0
      %805 = vmatpush1.bf16.msra.mxu0 0
      %806 = vmatprep.subr.bf16.mxu0 0
      %807 = vmatpush1.bf16.msra.mxu0 0
      %808 = vmatprep.subr.bf16.mxu0 0
      %809 = vmatpush1.bf16.msra.mxu0 0
      %810 = vmatprep.subr.bf16.mxu0 0
      %811 = vmatpush1.bf16.msra.mxu0 0
      %812 = vmatprep.subr.bf16.mxu0 0
      %813 = vmatpush1.bf16.msra.mxu0 0
      %814 = vmatprep.subr.bf16.mxu0 0
      %815 = vmatpush1.bf16.msra.mxu0 0
      %816 = vmatprep.subr.bf16.mxu0 0
      %817 = vmatpush1.bf16.msra.mxu0 0
      %818 = vmatprep.mubr.bf16.mxu0 0
      %819 = vmatmul.mubr.bf16.gmra.mrb[0].mxu0 %v774
      %v820 = vpop.f32.mrb[0].mxu0
      %v821 = vadd.f32 0.0, %v820
      %v822 = vpop.f32.mrb[0].mxu0
      %v823 = vadd.f32 0.0, %v822
      %v824 = vpop.f32.mrb[0].mxu0
      %v825 = vpop.f32.mrb[0].mxu0
      %826 = vdwg.mxu0
      %827 = vmatprep.subr.bf16.mxu0 0
      %828 = vmatpush1.bf16.msra.mxu0 %v724
      %829 = vmatprep.subr.bf16.mxu0 0
      %830 = vmatpush1.bf16.msra.mxu0 %v730
      %831 = vmatprep.subr.bf16.mxu0 0
      %832 = vmatpush1.bf16.msra.mxu0 %v736
      %833 = vmatprep.subr.bf16.mxu0 0
      %834 = vmatpush1.bf16.msra.mxu0 %v742
      %835 = vmatprep.subr.bf16.mxu0 0
      %836 = vmatpush1.bf16.msra.mxu0 %v784
      %837 = vmatprep.subr.bf16.mxu0 0
      %838 = vmatpush1.bf16.msra.mxu0 0
      %839 = vmatprep.subr.bf16.mxu0 0
      %840 = vmatpush1.bf16.msra.mxu0 0
      %841 = vmatprep.subr.bf16.mxu0 0
      %842 = vmatpush1.bf16.msra.mxu0 0
      %843 = vmatprep.subr.bf16.mxu0 0
      %844 = vmatpush1.bf16.msra.mxu0 0
      %845 = vmatprep.subr.bf16.mxu0 0
      %846 = vmatpush1.bf16.msra.mxu0 0
      %847 = vmatprep.subr.bf16.mxu0 0
      %848 = vmatpush1.bf16.msra.mxu0 0
      %849 = vmatprep.subr.bf16.mxu0 0
      %850 = vmatpush1.bf16.msra.mxu0 0
      %851 = vmatprep.subr.bf16.mxu0 0
      %852 = vmatpush1.bf16.msra.mxu0 0
      %853 = vmatprep.subr.bf16.mxu0 0
      %854 = vmatpush1.bf16.msra.mxu0 0
      %855 = vmatprep.subr.bf16.mxu0 0
      %856 = vmatpush1.bf16.msra.mxu0 0
      %857 = vmatprep.subr.bf16.mxu0 0
      %858 = vmatpush1.bf16.msra.mxu0 0
      %859 = vmatprep.mubr.bf16.mxu0 0
      %860 = vmatmul.mubr.bf16.gmra.mrb[0].mxu0 %v774
      %v861 = vpop.f32.mrb[0].mxu0
      %v862 = vadd.f32 0.0, %v861
      %v863 = vpop.f32.mrb[0].mxu0
      %v864 = vpop.f32.mrb[0].mxu0
      %v865 = vpop.f32.mrb[0].mxu0
      %866 = vdwg.mxu0
      %v867 = vld [vmem:[%s4] sm:$0xff]
      %869 = vset.pattern.permute.xlu0 2
      %870 = vperm.xlu0 %869, %v867
      %v871 = vpop.permute.xlu0 %870
      %v873 = vmul.f32 %v821, %v871
      %v874 = vmul.f32 %v823, %v871
      %v875 = vmul.f32 %v862, %v871
      %876 = vset.pattern.permute.xlu0 3
      %877 = vperm.xlu0 %876, %v867
      %v878 = vpop.permute.xlu0 %877
      %v880 = vadd.f32 %v873, %v878
      %v881 = vadd.f32 %v874, %v878
      %v882 = vadd.f32 %v875, %v878
      %v883 = vld [vmem:[%s3] sm:$0xf]
      %v884 = vpack.c.b16 %v281, %v281
      %v885 = vpack.c.b16 %v282, %v282
      %v886 = vpack.c.b16 %v283, %v283
      %vm887 = vcmask 31744
      %v889 = vsel %vm887, %v883, 0
      %v892 = vsel %vm309, %v884, 0
      %v895 = vsel %vm309, %v885, 0
      %v898 = vsel %vm309, %v886, 0
      %900 = vmatprep.subr.bf16.mxu0 %v895
      %901 = vmatpush1.bf16.msra.mxu0 %v892
      %902 = vmatprep.subr.bf16.mxu0 0
      %903 = vmatpush1.bf16.msra.mxu0 0
      %904 = vmatprep.subr.bf16.mxu0 0
      %905 = vmatpush1.bf16.msra.mxu0 0
      %906 = vmatprep.subr.bf16.mxu0 0
      %907 = vmatpush1.bf16.msra.mxu0 0
      %908 = vmatprep.subr.bf16.mxu0 0
      %909 = vmatpush1.bf16.msra.mxu0 0
      %910 = vmatprep.subr.bf16.mxu0 0
      %911 = vmatpush1.bf16.msra.mxu0 0
      %912 = vmatprep.subr.bf16.mxu0 0
      %913 = vmatpush1.bf16.msra.mxu0 0
      %914 = vmatprep.subr.bf16.mxu0 0
      %915 = vmatpush1.bf16.msra.mxu0 0
      %916 = vmatprep.subr.bf16.mxu0 0
      %917 = vmatpush1.bf16.msra.mxu0 0
      %918 = vmatprep.subr.bf16.mxu0 0
      %919 = vmatpush1.bf16.msra.mxu0 0
      %920 = vmatprep.subr.bf16.mxu0 0
      %921 = vmatpush1.bf16.msra.mxu0 0
      %922 = vmatprep.subr.bf16.mxu0 0
      %923 = vmatpush1.bf16.msra.mxu0 0
      %924 = vmatprep.subr.bf16.mxu0 0
      %925 = vmatpush1.bf16.msra.mxu0 0
      %926 = vmatprep.subr.bf16.mxu0 0
      %927 = vmatpush1.bf16.msra.mxu0 0
      %928 = vmatprep.subr.bf16.mxu0 0
      %929 = vmatpush1.bf16.msra.mxu0 0
      %930 = vmatprep.subr.bf16.mxu0 0
      %931 = vmatpush1.bf16.msra.mxu0 0
      %932 = vmatprep.mubr.bf16.mxu0 0
      %933 = vmatmul.mubr.bf16.gmra.mrb[0].mxu0 %v889
      %v934 = vpop.f32.mrb[0].mxu0
      %v935 = vadd.f32 0.0, %v934
      %v936 = vpop.f32.mrb[0].mxu0
      %v937 = vadd.f32 0.0, %v936
      %v938 = vpop.f32.mrb[0].mxu0
      %v939 = vpop.f32.mrb[0].mxu0
      %940 = vdwg.mxu0
      %941 = vmatprep.subr.bf16.mxu0 0
      %942 = vmatpush1.bf16.msra.mxu0 %v898
      %943 = vmatprep.subr.bf16.mxu0 0
      %944 = vmatpush1.bf16.msra.mxu0 0
      %945 = vmatprep.subr.bf16.mxu0 0
      %946 = vmatpush1.bf16.msra.mxu0 0
      %947 = vmatprep.subr.bf16.mxu0 0
      %948 = vmatpush1.bf16.msra.mxu0 0
      %949 = vmatprep.subr.bf16.mxu0 0
      %950 = vmatpush1.bf16.msra.mxu0 0
      %951 = vmatprep.subr.bf16.mxu0 0
      %952 = vmatpush1.bf16.msra.mxu0 0
      %953 = vmatprep.subr.bf16.mxu0 0
      %954 = vmatpush1.bf16.msra.mxu0 0
      %955 = vmatprep.subr.bf16.mxu0 0
      %956 = vmatpush1.bf16.msra.mxu0 0
      %957 = vmatprep.subr.bf16.mxu0 0
      %958 = vmatpush1.bf16.msra.mxu0 0
      %959 = vmatprep.subr.bf16.mxu0 0
      %960 = vmatpush1.bf16.msra.mxu0 0
      %961 = vmatprep.subr.bf16.mxu0 0
      %962 = vmatpush1.bf16.msra.mxu0 0
      %963 = vmatprep.subr.bf16.mxu0 0
      %964 = vmatpush1.bf16.msra.mxu0 0
      %965 = vmatprep.subr.bf16.mxu0 0
      %966 = vmatpush1.bf16.msra.mxu0 0
      %967 = vmatprep.subr.bf16.mxu0 0
      %968 = vmatpush1.bf16.msra.mxu0 0
      %969 = vmatprep.subr.bf16.mxu0 0
      %970 = vmatpush1.bf16.msra.mxu0 0
      %971 = vmatprep.subr.bf16.mxu0 0
      %972 = vmatpush1.bf16.msra.mxu0 0
      %973 = vmatprep.mubr.bf16.mxu0 0
      %974 = vmatmul.mubr.bf16.gmra.mrb[0].mxu0 %v889
      %v975 = vpop.f32.mrb[0].mxu0
      %v976 = vadd.f32 0.0, %v975
      %v977 = vpop.f32.mrb[0].mxu0
      %v978 = vpop.f32.mrb[0].mxu0
      %v979 = vpop.f32.mrb[0].mxu0
      %980 = vdwg.mxu0
      %981 = vset.pattern.permute.xlu0 4
      %982 = vperm.xlu0 %981, %v867
      %v983 = vpop.permute.xlu0 %982
      %v985 = vmul.f32 %v935, %v983
      %v986 = vmul.f32 %v937, %v983
      %v987 = vmul.f32 %v976, %v983
      %v988 = vadd.f32 %v880, %v985
      %v989 = vadd.f32 %v881, %v986
      %v990 = vadd.f32 %v882, %v987
      %991 = vset.pattern.permute.xlu0 5
      %992 = vperm.xlu0 %991, %v867
      %v993 = vpop.permute.xlu0 %992
      %v995 = vadd.f32 %v988, %v993
      %v996 = vadd.f32 %v989, %v993
      %v997 = vadd.f32 %v990, %v993
      %v998 = vmax.f32 %v995, 0.0
      %v999 = vmax.f32 %v996, 0.0
      %v1000 = vmax.f32 %v997, 0.0
      %1001 = vset.pattern.permute.xlu0 6
      %1002 = vperm.xlu0 %1001, %v867
      %v1003 = vpop.permute.xlu0 %1002
      %v1005 = vmul.f32 %v998, %v1003
      %v1006 = vmul.f32 %v999, %v1003
      %v1007 = vmul.f32 %v1000, %v1003
      %v1008 = vrot.slane %v1005, 4
      %v1009 = vadd.f32 %v1005, %v1008
      %v1010 = vrot.slane %v1009, 2
      %v1011 = vadd.f32 %v1009, %v1010
      %v1012 = vrot.slane %v1011, 1
      %v1013 = vadd.f32 %v1011, %v1012
      %v1014 = vrot.slane %v1006, 4
      %v1015 = vadd.f32 %v1006, %v1014
      %v1016 = vrot.slane %v1015, 2
      %v1017 = vadd.f32 %v1015, %v1016
      %v1018 = vrot.slane %v1017, 1
      %v1019 = vadd.f32 %v1017, %v1018
      %vm1020 = vcmask 261120
      %v1021 = vsel %vm1020, %v1007, 0.0
      %v1022 = vrot.slane %v1021, 4
      %v1023 = vadd.f32 %v1021, %v1022
      %v1024 = vrot.slane %v1023, 2
      %v1025 = vadd.f32 %v1023, %v1024
      %v1026 = vrot.slane %v1025, 1
      %v1027 = vadd.f32 %v1025, %v1026
      %s1028 = sld [smem:[#allocation3]]
      %v1029 = vstv %s1028
      %v1030 = vadd.f32 %v1013, %v1029
      %v1031 = vadd.f32 %v1019, %v1029
      %v1032 = vadd.f32 %v1027, %v1029
      %v1033 = vxor.u32 %v1030, 2147483648
      %v1034 = vxor.u32 %v1031, 2147483648
      %v1035 = vxor.u32 %v1032, 2147483648
      %v1036 = vmul.f32 %v1033, 1.442695
      %v1037 = vpow.pop %v1036
      %v1038 = vmul.f32 %v1034, 1.442695
      %v1039 = vpow.pop %v1038
      %v1040 = vmul.f32 %v1035, 1.442695
      %v1041 = vpow.pop %v1040
      %v1042 = vadd.f32 %v1037, 1.0
      %v1043 = vadd.f32 %v1039, 1.0
      %v1044 = vadd.f32 %v1041, 1.0
      %v1045 = vrcp.pop %v1042
      %v1046 = vmul.f32 1.0, %v1045
      %v1047 = vrcp.pop %v1043
      %v1048 = vmul.f32 1.0, %v1047
      %v1049 = vrcp.pop %v1044
      %v1050 = vmul.f32 1.0, %v1049
      %v1051 = vmul.f32 %v998, %v1046
      %v1052 = vmul.f32 %v999, %v1048
      %v1053 = vmul.f32 %v1000, %v1050
      %1054 = vst [vmem:[%s252] sm:$0xff] %v1051
      %1055 = vst [vmem:[%s252 + $0x8] sm:$0xff] %v1052
      %1056 = vst.msk [vmem:[%s252 + $0x10] sm:$0xff] %vm1020, %v1053
      %p1057 = scmp.lt.s32.totalorder %s18, 1
      %s1058 = scalar_select %p1057, %s18, 1
      %s1059 = smul.addr %s1058, 3
      %s1060 = smul.addr %s1059, 8
      %s1061 = scalar_lea.vmem %s6, %s1060
      // Predicated region
      $region45: #{basic_block_with_attention.1} parent=43 // pred_check
        %p1062 = pneg %p167
      $region46: #{basic_block_with_attention.1} parent=43 // pred_check_branch
        %1064 = sbr.rel (%p1062) target = $region48
      $region47: #{basic_block_with_attention.1} parent=43 // pred_region
        _
      $region48: #{basic_block_with_attention.1} parent=43 // pred_fallthru
        _
    $region44: #{basic_block_with_attention.1} parent=5 // pred_fallthru
      _
    %p1065 = scmp.le.s32.totalorder 2, %s13
    // Predicated region
    $region49: #{basic_block_with_attention.1} parent=5 // pred_check
      %p1066 = pneg %p1065
    $region50: #{basic_block_with_attention.1} parent=5 // pred_check_branch
      %1068 = sbr.rel (%p1066) target = $region52
    $region51: #{basic_block_with_attention.1} parent=5 // pred_region
      %s1069 = ssub.s32 %s13, 2
      // Predicated region
      $region53: #{basic_block_with_attention.1} parent=51 // pred_check
        %p1070 = pneg %p173
      $region54: #{basic_block_with_attention.1} parent=51 // pred_check_branch
        %1072 = sbr.rel (%p1070) target = $region56
      $region55: #{basic_block_with_attention.1} parent=51 // pred_region
        %p1073 = scmp.lt.s32.totalorder %s19, 1
        %s1074 = scalar_select %p1073, %s19, 1
        %s1075 = smul.addr %s1074, 3
        %s1076 = smul.addr %s1075, 8
        %s1077 = scalar_lea.vmem %s6, %s1076
      $region56: #{basic_block_with_attention.1} parent=51 // pred_fallthru
        _
    $region52: #{basic_block_with_attention.1} parent=5 // pred_fallthru
      _
  $region6: #{basic_block_with_attention.1} parent=0 // loop_footer
    %s17 = sadd.s32 1, %s13
  $region7: #{basic_block_with_attention.1} parent=0 // loop_footer_branch
    %12 = sbr.rel target = $region3
  $region8: #{basic_block_with_attention.1} parent=0 // loop_exit
    _

</llo_original>
